<compile_context>
chip_gen: v7x
topology: tpu7x:2x2x1
jax: 0.10.0
libtpu: 0.0.40
codegen_flags: <defaults>
</compile_context>

<pallas_src>
import jax
import jax.numpy as jnp
from jax.experimental import pallas as pl
from jax.experimental.pallas import tpu as pltpu

MODEL_DIM = 32
HIDDEN_DIM = 64
SEQ = 8
BATCH = 2

LANE = 128  # pad all lane (last) dims to a full vreg lane width


def feedforward_kernel(x_ref, w1_ref, b1_ref, w2_ref, b2_ref, o_ref):
    # x_ref : (N, Dp)  bf16      (Dp = 128, lane-padded)
    # w1_ref: (Dp, Hp) bf16, b1_ref: (1, Hp) f32   (Hp = 128, pre-transposed + padded)
    # w2_ref: (Hp, Dp) bf16, b2_ref: (1, Dp) f32
    # o_ref : (N, Dp)  f32       (lane-dense, unmasked stores)

    # fc1 + bias + ReLU: bf16 operands, f32 accumulation on the MXU.
    h = jnp.dot(x_ref[...], w1_ref[...], preferred_element_type=jnp.float32)
    h = jnp.maximum(h + b1_ref[...], 0.0)

    # dropout == identity (eval mode)

    # fc2 + bias: feed bf16 to the MXU again (avoids f32-matmul decomposition on v5e).
    y = jnp.dot(h.astype(w2_ref.dtype), w2_ref[...], preferred_element_type=jnp.float32)
    o_ref[...] = (y + b2_ref[...]).astype(o_ref.dtype)


def feedforward(x, fc1_w, fc1_b, fc2_w, fc2_b):
    """x: (..., model_dim). Weights in PyTorch nn.Linear layout (out, in), biases (out,)."""
    orig_shape = x.shape
    D = orig_shape[-1]
    H = fc1_w.shape[0]
    Dp = max(LANE, ((D + LANE - 1) // LANE) * LANE)
    Hp = max(LANE, ((H + LANE - 1) // LANE) * LANE)

    # ---- Wrapper-side (XLA, once): flatten, pre-transpose, zero-pad, cast to bf16. ----
    x2d = x.reshape(-1, D)
    N = x2d.shape[0]

    x_p = jnp.pad(x2d, ((0, 0), (0, Dp - D))).astype(jnp.bfloat16)          # (N, Dp)
    w1t = jnp.pad(fc1_w.T, ((0, Dp - D), (0, Hp - H))).astype(jnp.bfloat16)  # (Dp, Hp)
    w2t = jnp.pad(fc2_w.T, ((0, Hp - H), (0, Dp - D))).astype(jnp.bfloat16)  # (Hp, Dp)
    b1r = jnp.pad(fc1_b, (0, Hp - H)).reshape(1, Hp).astype(jnp.float32)     # (1, Hp)
    b2r = jnp.pad(fc2_b, (0, Dp - D)).reshape(1, Dp).astype(jnp.float32)     # (1, Dp)

    flops = 2 * N * Dp * Hp * 2  # two matmuls
    bytes_accessed = (x_p.size * 2 + w1t.size * 2 + w2t.size * 2
                      + b1r.size * 4 + b2r.size * 4 + N * Dp * 4)

    out_p = pl.pallas_call(
        feedforward_kernel,
        out_shape=jax.ShapeDtypeStruct((N, Dp), x.dtype),
        grid_spec=pl.GridSpec(
            grid=(1,),  # collapsed grid: whole (tiny) problem is resident in VMEM
            in_specs=[
                pl.BlockSpec((N, Dp), lambda i: (0, 0)),
                pl.BlockSpec((Dp, Hp), lambda i: (0, 0)),
                pl.BlockSpec((1, Hp), lambda i: (0, 0)),
                pl.BlockSpec((Hp, Dp), lambda i: (0, 0)),
                pl.BlockSpec((1, Dp), lambda i: (0, 0)),
            ],
            out_specs=pl.BlockSpec((N, Dp), lambda i: (0, 0)),
        ),
        compiler_params=pltpu.CompilerParams(
            dimension_semantics=("arbitrary",),
        ),
        cost_estimate=pl.CostEstimate(
            flops=flops, transcendentals=0, bytes_accessed=bytes_accessed),
    )(x_p, w1t, b1r, w2t, b2r)

    # Slice the lane padding back off and restore leading dims (free layout plumbing).
    return out_p[:, :D].reshape(orig_shape)


def init_params(key):
    """Deterministic synthetic parameters in PyTorch nn.Linear layout."""
    k1, k2, k3, k4 = jax.random.split(key, 4)
    fc1_w = jax.random.normal(k1, (HIDDEN_DIM, MODEL_DIM), jnp.float32) * 0.05
    fc1_b = jax.random.normal(k2, (HIDDEN_DIM,), jnp.float32) * 0.01
    fc2_w = jax.random.normal(k3, (MODEL_DIM, HIDDEN_DIM), jnp.float32) * 0.05
    fc2_b = jax.random.normal(k4, (MODEL_DIM,), jnp.float32) * 0.01
    return fc1_w, fc1_b, fc2_w, fc2_b


def reference_jax(x, fc1_w, fc1_b, fc2_w, fc2_b):
    """Pure-JAX f32 reference of the PyTorch forward (eval-mode dropout)."""
    h = jnp.maximum(x @ fc1_w.T + fc1_b, 0.0)
    return h @ fc2_w.T + fc2_b


if __name__ == "__main__":
    key = jax.random.PRNGKey(0)
    k_x, k_p = jax.random.split(key)

    x = jax.random.normal(k_x, (BATCH, SEQ, MODEL_DIM), jnp.float32)
    fc1_w, fc1_b, fc2_w, fc2_b = init_params(k_p)

    out = feedforward(x, fc1_w, fc1_b, fc2_w, fc2_b)
    jax.block_until_ready(out)

    ref = reference_jax(x, fc1_w, fc1_b, fc2_w, fc2_b)
    assert out.shape == ref.shape, "shape mismatch"
    # bf16 MXU operands with f32 accumulation vs pure-f32 reference: mixed-precision
    # tolerance (observed error is ~1e-3 absolute at these magnitudes).
    assert jnp.allclose(out, ref, atol=2e-2, rtol=2e-2), "feedforward mismatch"

    print("KERNEL_OK")
</pallas_src>

<mosaic_0001>
module attributes {stable_mosaic.version = 11 : i64} {
  func.func @feedforward_kernel(%arg0: i32, %arg1: memref<16x128xbf16, #tpu.memory_space<vmem>>, %arg2: memref<128x128xbf16, #tpu.memory_space<vmem>>, %arg3: memref<1x128xf32, #tpu.memory_space<vmem>>, %arg4: memref<128x128xbf16, #tpu.memory_space<vmem>>, %arg5: memref<1x128xf32, #tpu.memory_space<vmem>>, %arg6: memref<16x128xf32, #tpu.memory_space<vmem>>) attributes {dimension_semantics = [#tpu.dimension_semantics<arbitrary>], iteration_bounds = array<i64: 1>, scalar_prefetch = 0 : i64, scratch_operands = 0 : i64, tpu.core_type = #tpu.core_type<tc>, window_params = [{pipeline_mode = #tpu.pipeline_mode<synchronous>, transform_indices = @transform_0, window_bounds = array<i64: 16, 128>}, {pipeline_mode = #tpu.pipeline_mode<synchronous>, transform_indices = @transform_1, window_bounds = array<i64: 128, 128>}, {pipeline_mode = #tpu.pipeline_mode<synchronous>, transform_indices = @transform_2, window_bounds = array<i64: 1, 128>}, {pipeline_mode = #tpu.pipeline_mode<synchronous>, transform_indices = @transform_3, window_bounds = array<i64: 128, 128>}, {pipeline_mode = #tpu.pipeline_mode<synchronous>, transform_indices = @transform_4, window_bounds = array<i64: 1, 128>}, {pipeline_mode = #tpu.pipeline_mode<synchronous>, transform_indices = @transform_5, window_bounds = array<i64: 16, 128>}]} {
    %c0 = arith.constant 0 : index
    %c0_0 = arith.constant 0 : index
    %0 = vector.load %arg1[%c0, %c0_0] : memref<16x128xbf16, #tpu.memory_space<vmem>>, vector<16x128xbf16>
    %c0_1 = arith.constant 0 : index
    %c0_2 = arith.constant 0 : index
    %1 = vector.load %arg2[%c0_1, %c0_2] : memref<128x128xbf16, #tpu.memory_space<vmem>>, vector<128x128xbf16>
    %cst = arith.constant dense<0.000000e+00> : vector<16x128xf32>
    %2 = tpu.matmul %0, %1, %cst {dimension_numbers = #tpu.dot_dimension_numbers<[1], [0], [0], [1], [0, 0, 1, 1], [], []>} : vector<16x128xbf16>, vector<128x128xbf16>, vector<16x128xf32> -> vector<16x128xf32>
    %c0_3 = arith.constant 0 : index
    %c0_4 = arith.constant 0 : index
    %3 = vector.load %arg3[%c0_3, %c0_4] : memref<1x128xf32, #tpu.memory_space<vmem>>, vector<1x128xf32>
    %4 = vector.broadcast %3 : vector<1x128xf32> to vector<16x128xf32>
    %5 = arith.addf %2, %4 : vector<16x128xf32>
    %cst_5 = arith.constant 0.000000e+00 : f32
    %6 = vector.broadcast %cst_5 : f32 to vector<16x128xf32>
    %7 = arith.maximumf %5, %6 : vector<16x128xf32>
    %8 = arith.truncf %7 : vector<16x128xf32> to vector<16x128xbf16>
    %c0_6 = arith.constant 0 : index
    %c0_7 = arith.constant 0 : index
    %9 = vector.load %arg4[%c0_6, %c0_7] : memref<128x128xbf16, #tpu.memory_space<vmem>>, vector<128x128xbf16>
    %cst_8 = arith.constant dense<0.000000e+00> : vector<16x128xf32>
    %10 = tpu.matmul %8, %9, %cst_8 {dimension_numbers = #tpu.dot_dimension_numbers<[1], [0], [0], [1], [0, 0, 1, 1], [], []>} : vector<16x128xbf16>, vector<128x128xbf16>, vector<16x128xf32> -> vector<16x128xf32>
    %c0_9 = arith.constant 0 : index
    %c0_10 = arith.constant 0 : index
    %11 = vector.load %arg5[%c0_9, %c0_10] : memref<1x128xf32, #tpu.memory_space<vmem>>, vector<1x128xf32>
    %12 = vector.broadcast %11 : vector<1x128xf32> to vector<16x128xf32>
    %13 = arith.addf %10, %12 : vector<16x128xf32>
    %c0_11 = arith.constant 0 : index
    %c0_12 = arith.constant 0 : index
    %14 = vector.load %arg6[%c0_11, %c0_12] : memref<16x128xf32, #tpu.memory_space<vmem>>, vector<16x128xf32>
    tpu.vector_store %arg6[%c0_11, %c0_12], %13 {strides = array<i32>} : memref<16x128xf32, #tpu.memory_space<vmem>>, vector<16x128xf32>,
    return
  }
  func.func @transform_0(%arg0: i32) -> (i32, i32) {
    %c0_i32 = arith.constant 0 : i32
    %c0_i32_0 = arith.constant 0 : i32
    %c0_i32_1 = arith.constant 0 : i32
    return %c0_i32, %c0_i32_0 : i32, i32
  }
  func.func @transform_1(%arg0: i32) -> (i32, i32) {
    %c0_i32 = arith.constant 0 : i32
    %c0_i32_0 = arith.constant 0 : i32
    %c0_i32_1 = arith.constant 0 : i32
    return %c0_i32, %c0_i32_0 : i32, i32
  }
  func.func @transform_2(%arg0: i32) -> (i32, i32) {
    %c0_i32 = arith.constant 0 : i32
    %c0_i32_0 = arith.constant 0 : i32
    %c0_i32_1 = arith.constant 0 : i32
    return %c0_i32, %c0_i32_0 : i32, i32
  }
  func.func @transform_3(%arg0: i32) -> (i32, i32) {
    %c0_i32 = arith.constant 0 : i32
    %c0_i32_0 = arith.constant 0 : i32
    %c0_i32_1 = arith.constant 0 : i32
    return %c0_i32, %c0_i32_0 : i32, i32
  }
  func.func @transform_4(%arg0: i32) -> (i32, i32) {
    %c0_i32 = arith.constant 0 : i32
    %c0_i32_0 = arith.constant 0 : i32
    %c0_i32_1 = arith.constant 0 : i32
    return %c0_i32, %c0_i32_0 : i32, i32
  }
  func.func @transform_5(%arg0: i32) -> (i32, i32) {
    %c0_i32 = arith.constant 0 : i32
    %c0_i32_0 = arith.constant 0 : i32
    %c0_i32_1 = arith.constant 0 : i32
    return %c0_i32, %c0_i32_0 : i32, i32
  }
}

</mosaic_0001>

<llo_original>
// kernel: tpu_custom_call.1
$region0: #{tpu_custom_call.1}
  #allocation0 [shape = 'u32[]', space=smem, size = 0x4, offset = 0x4, fixed_abs, tag = 'smem constant byte address 0x4 - core index']
  #allocation1 [shape = 'u32[144,128]{1,0:T(1,128)}', space=vmem, size = 0x12000, scoped, tag = 'internal scratch']
  %s0 = inlined_call_operand.hbm [shape: bf16[16,128], index: 0, kind: input, shape index: {}]
  %s1 = inlined_call_operand.hbm [shape: bf16[128,128], index: 1, kind: input, shape index: {}]
  %s2 = inlined_call_operand.vmem [shape: f32[1,128], index: 2, kind: input, shape index: {}]
  %s3 = inlined_call_operand.hbm [shape: bf16[128,128], index: 3, kind: input, shape index: {}]
  %s4 = inlined_call_operand.vmem [shape: f32[1,128], index: 4, kind: input, shape index: {}]
  %s5 = inlined_call_operand.hbm [shape: f32[16,128], index: 5, kind: output, shape index: {}]
  %s6 = sld [smem:[#allocation0]]
  $region42: #{tpu_custom_call.1} parent=0
    _
  %s8 = ssub.s32 1, %s6
  %s9 = scalar_select 0, %s8, %s6
  $region1: #{tpu_custom_call.1} parent=0
    #allocation2 [shape = 'u8[4096]{0}', space=vmem, size = 0x1000, scoped, tag = 'input window, operand 0, single buffered']
    #allocation3 [shape = 's32[1]{0}', space=sflag, size = 0x4, scoped, tag = 'scoped memory for tpu_custom_call.1']
    #allocation4 [shape = 's32[1]{0}', space=sflag, size = 0x4, scoped, tag = 'scoped memory for tpu_custom_call.1']
    #allocation5 [shape = 'u8[32768]{0}', space=vmem, size = 0x8000, scoped, tag = 'input window, operand 1, single buffered']
    #allocation6 [shape = 's32[1]{0}', space=sflag, size = 0x4, scoped, tag = 'scoped memory for tpu_custom_call.1']
    #allocation7 [shape = 'u8[32768]{0}', space=vmem, size = 0x8000, scoped, tag = 'input window, operand 3, single buffered']
    #allocation8 [shape = 'u8[8192]{0}', space=vmem, size = 0x2000, scoped, tag = 'output window, operand 0, single buffered']
    %10 = vsyncpa [#allocation3], 0
    %11 = vsyncpa [#allocation6], 0
    %12 = vsyncpa [#allocation4], 0
    // Predicated region
    $region2: #{tpu_custom_call.1} parent=1 // pred_check
      _
    $region3: #{tpu_custom_call.1} parent=1 // pred_check_branch
      %14 = sbr.rel (0) target = $region5
    $region4: #{tpu_custom_call.1} parent=1 // pred_region
      %s16 = ssub.s32 128, 128
      %17 = vsyncadd [#allocation3], %s16
      %s18 = sshll.u32 [#allocation2], 4
      %s19 = int_to_ptr.vmem [resolvable:$true] %s18
      %24 = dma.hbm_to_vmem [thread:$0]  %s0, 128, %s19, [#allocation3], 64, 64, 4
    $region5: #{tpu_custom_call.1} parent=1 // pred_fallthru
      _
    // Predicated region
    $region6: #{tpu_custom_call.1} parent=1 // pred_check
      _
    $region7: #{tpu_custom_call.1} parent=1 // pred_check_branch
      %26 = sbr.rel (0) target = $region9
    $region8: #{tpu_custom_call.1} parent=1 // pred_region
      %s28 = ssub.s32 1024, 1024
      %29 = vsyncadd [#allocation6], %s28
      %s30 = sshll.u32 [#allocation5], 4
      %s31 = int_to_ptr.vmem [resolvable:$true] %s30
      %36 = dma.hbm_to_vmem [thread:$0]  %s1, 1024, %s31, [#allocation6], 64, 64, 4
    $region9: #{tpu_custom_call.1} parent=1 // pred_fallthru
      _
    // Predicated region
    $region10: #{tpu_custom_call.1} parent=1 // pred_check
      _
    $region11: #{tpu_custom_call.1} parent=1 // pred_check_branch
      %38 = sbr.rel (0) target = $region13
    $region12: #{tpu_custom_call.1} parent=1 // pred_region
      _
    $region13: #{tpu_custom_call.1} parent=1 // pred_fallthru
      _
    // Predicated region
    $region14: #{tpu_custom_call.1} parent=1 // pred_check
      _
    $region15: #{tpu_custom_call.1} parent=1 // pred_check_branch
      %40 = sbr.rel (0) target = $region17
    $region16: #{tpu_custom_call.1} parent=1 // pred_region
      %s42 = ssub.s32 1024, 1024
      %43 = vsyncadd [#allocation6], %s42
      %s44 = sshll.u32 [#allocation7], 4
      %s45 = int_to_ptr.vmem [resolvable:$true] %s44
      %50 = dma.hbm_to_vmem [thread:$0]  %s3, 1024, %s45, [#allocation6], 64, 64, 4
    $region17: #{tpu_custom_call.1} parent=1 // pred_fallthru
      _
    // Predicated region
    $region18: #{tpu_custom_call.1} parent=1 // pred_check
      _
    $region19: #{tpu_custom_call.1} parent=1 // pred_check_branch
      %52 = sbr.rel (0) target = $region21
    $region20: #{tpu_custom_call.1} parent=1 // pred_region
      _
    $region21: #{tpu_custom_call.1} parent=1 // pred_fallthru
      _
    // Predicated region
    $region22: #{tpu_custom_call.1} parent=1 // pred_check
      _
    $region23: #{tpu_custom_call.1} parent=1 // pred_check_branch
      %54 = sbr.rel (0) target = $region25
    $region24: #{tpu_custom_call.1} parent=1 // pred_region
      %55 = dma.done [#allocation3], 128
    $region25: #{tpu_custom_call.1} parent=1 // pred_fallthru
      _
    // Predicated region
    $region26: #{tpu_custom_call.1} parent=1 // pred_check
      _
    $region27: #{tpu_custom_call.1} parent=1 // pred_check_branch
      %57 = sbr.rel (0) target = $region29
    $region28: #{tpu_custom_call.1} parent=1 // pred_region
      %58 = dma.done [#allocation6], 1024
    $region29: #{tpu_custom_call.1} parent=1 // pred_fallthru
      _
    // Predicated region
    $region30: #{tpu_custom_call.1} parent=1 // pred_check
      _
    $region31: #{tpu_custom_call.1} parent=1 // pred_check_branch
      %60 = sbr.rel (0) target = $region33
    $region32: #{tpu_custom_call.1} parent=1 // pred_region
      %61 = dma.done [#allocation6], 1024
    $region33: #{tpu_custom_call.1} parent=1 // pred_fallthru
      _
    %v63 = vld [vmem:[#allocation2] sm:$0xf]
    %v64 = vld [vmem:[#allocation2 + $0x4] sm:$0xf]
    %v65 = vld [vmem:[#allocation5] sm:$0xf]
    %v66 = vld [vmem:[#allocation5 + $0x4] sm:$0xf]
    %v67 = vld [vmem:[#allocation5 + $0x8] sm:$0xf]
    %v68 = vld [vmem:[#allocation5 + $0xc] sm:$0xf]
    %v69 = vld [vmem:[#allocation5 + $0x10] sm:$0xf]
    %v70 = vld [vmem:[#allocation5 + $0x14] sm:$0xf]
    %v71 = vld [vmem:[#allocation5 + $0x18] sm:$0xf]
    %v72 = vld [vmem:[#allocation5 + $0x1c] sm:$0xf]
    %v73 = vld [vmem:[#allocation5 + $0x20] sm:$0xf]
    %v74 = vld [vmem:[#allocation5 + $0x24] sm:$0xf]
    %v75 = vld [vmem:[#allocation5 + $0x28] sm:$0xf]
    %v76 = vld [vmem:[#allocation5 + $0x2c] sm:$0xf]
    %v77 = vld [vmem:[#allocation5 + $0x30] sm:$0xf]
    %v78 = vld [vmem:[#allocation5 + $0x34] sm:$0xf]
    %v79 = vld [vmem:[#allocation5 + $0x38] sm:$0xf]
    %v80 = vld [vmem:[#allocation5 + $0x3c] sm:$0xf]
    %v81 = vld [vmem:[%s2] sm:$0x1]
    %v83 = vlaneseq
    %v84 = vshrl.u32 %v83, 7
    %v85 = vsub.s32 0, %v84
    %v86 = vrot.slane %v81, %v85
    %v90 = vunpack.c.l.b16 %v63
    %v91 = vunpack.c.l.b16 %v64
    %v92 = vpack.c.b16 %v91, %v90
    %v110 = vunpack.c.l.b16 %v65
    %v111 = vunpack.c.l.b16 %v66
    %v112 = vunpack.c.l.b16 %v67
    %v113 = vunpack.c.l.b16 %v68
    %v114 = vunpack.c.l.b16 %v69
    %v115 = vunpack.c.l.b16 %v70
    %v116 = vunpack.c.l.b16 %v71
    %v117 = vunpack.c.l.b16 %v72
    %v118 = vunpack.c.l.b16 %v73
    %v119 = vunpack.c.l.b16 %v74
    %v120 = vunpack.c.l.b16 %v75
    %v121 = vunpack.c.l.b16 %v76
    %v122 = vunpack.c.l.b16 %v77
    %v123 = vunpack.c.l.b16 %v78
    %v124 = vunpack.c.l.b16 %v79
    %v125 = vunpack.c.l.b16 %v80
    %v126 = vpack.c.b16 %v111, %v110
    %v127 = vpack.c.b16 %v113, %v112
    %v128 = vpack.c.b16 %v115, %v114
    %v129 = vpack.c.b16 %v117, %v116
    %v130 = vpack.c.b16 %v119, %v118
    %v131 = vpack.c.b16 %v121, %v120
    %v132 = vpack.c.b16 %v123, %v122
    %v133 = vpack.c.b16 %v125, %v124
    %142 = vmatprep.subr.bf16.mxu0 0
    %143 = vmatpush1.bf16.msra.mxu0 %v126
    %144 = vmatprep.subr.bf16.mxu0 0
    %145 = vmatpush1.bf16.msra.mxu0 %v127
    %146 = vmatprep.subr.bf16.mxu0 0
    %147 = vmatpush1.bf16.msra.mxu0 %v128
    %148 = vmatprep.subr.bf16.mxu0 0
    %149 = vmatpush1.bf16.msra.mxu0 %v129
    %150 = vmatprep.subr.bf16.mxu0 0
    %151 = vmatpush1.bf16.msra.mxu0 %v130
    %152 = vmatprep.subr.bf16.mxu0 0
    %153 = vmatpush1.bf16.msra.mxu0 %v131
    %154 = vmatprep.subr.bf16.mxu0 0
    %155 = vmatpush1.bf16.msra.mxu0 %v132
    %156 = vmatprep.subr.bf16.mxu0 0
    %157 = vmatpush1.bf16.msra.mxu0 %v133
    %158 = vmatprep.subr.bf16.mxu0 0
    %159 = vmatpush1.bf16.msra.mxu0 0
    %160 = vmatprep.subr.bf16.mxu0 0
    %161 = vmatpush1.bf16.msra.mxu0 0
    %162 = vmatprep.subr.bf16.mxu0 0
    %163 = vmatpush1.bf16.msra.mxu0 0
    %164 = vmatprep.subr.bf16.mxu0 0
    %165 = vmatpush1.bf16.msra.mxu0 0
    %166 = vmatprep.subr.bf16.mxu0 0
    %167 = vmatpush1.bf16.msra.mxu0 0
    %168 = vmatprep.subr.bf16.mxu0 0
    %169 = vmatpush1.bf16.msra.mxu0 0
    %170 = vmatprep.subr.bf16.mxu0 0
    %171 = vmatpush1.bf16.msra.mxu0 0
    %172 = vmatprep.subr.bf16.mxu0 0
    %173 = vmatpush1.bf16.msra.mxu0 0
    %174 = vmatprep.mubr.bf16.mxu0 0
    %175 = vmatmul.mubr.bf16.gmra.mrb[0].mxu0 %v92
    %v176 = vpop.f32.mrb[0].mxu0
    %v177 = vadd.f32 %v86, %v176
    %v178 = vpop.f32.mrb[0].mxu0
    %v179 = vpop.f32.mrb[0].mxu0
    %v180 = vadd.f32 %v86, %v179
    %v181 = vpop.f32.mrb[0].mxu0
    %182 = vdwg.mxu0
    %v183 = vmax.f32 %v177, 0.0
    %v184 = vmax.f32 %v180, 0.0
    %v185 = vpack.c.bf16 %v184, %v183
    %v186 = vld [vmem:[#allocation7] sm:$0xf]
    %v187 = vld [vmem:[#allocation7 + $0x4] sm:$0xf]
    %v188 = vld [vmem:[#allocation7 + $0x8] sm:$0xf]
    %v189 = vld [vmem:[#allocation7 + $0xc] sm:$0xf]
    %v190 = vld [vmem:[#allocation7 + $0x10] sm:$0xf]
    %v191 = vld [vmem:[#allocation7 + $0x14] sm:$0xf]
    %v192 = vld [vmem:[#allocation7 + $0x18] sm:$0xf]
    %v193 = vld [vmem:[#allocation7 + $0x1c] sm:$0xf]
    %v194 = vld [vmem:[#allocation7 + $0x20] sm:$0xf]
    %v195 = vld [vmem:[#allocation7 + $0x24] sm:$0xf]
    %v196 = vld [vmem:[#allocation7 + $0x28] sm:$0xf]
    %v197 = vld [vmem:[#allocation7 + $0x2c] sm:$0xf]
    %v198 = vld [vmem:[#allocation7 + $0x30] sm:$0xf]
    %v199 = vld [vmem:[#allocation7 + $0x34] sm:$0xf]
    %v200 = vld [vmem:[#allocation7 + $0x38] sm:$0xf]
    %v201 = vld [vmem:[#allocation7 + $0x3c] sm:$0xf]
    %v202 = vld [vmem:[%s4] sm:$0x1]
    %v204 = vlaneseq
    %v205 = vshrl.u32 %v204, 7
    %v206 = vsub.s32 0, %v205
    %v207 = vrot.slane %v202, %v206
    %v225 = vunpack.c.l.b16 %v186
    %v226 = vunpack.c.l.b16 %v187
    %v227 = vunpack.c.l.b16 %v188
    %v228 = vunpack.c.l.b16 %v189
    %v229 = vunpack.c.l.b16 %v190
    %v230 = vunpack.c.l.b16 %v191
    %v231 = vunpack.c.l.b16 %v192
    %v232 = vunpack.c.l.b16 %v193
    %v233 = vunpack.c.l.b16 %v194
    %v234 = vunpack.c.l.b16 %v195
    %v235 = vunpack.c.l.b16 %v196
    %v236 = vunpack.c.l.b16 %v197
    %v237 = vunpack.c.l.b16 %v198
    %v238 = vunpack.c.l.b16 %v199
    %v239 = vunpack.c.l.b16 %v200
    %v240 = vunpack.c.l.b16 %v201
    %v241 = vpack.c.b16 %v226, %v225
    %v242 = vpack.c.b16 %v228, %v227
    %v243 = vpack.c.b16 %v230, %v229
    %v244 = vpack.c.b16 %v232, %v231
    %v245 = vpack.c.b16 %v234, %v233
    %v246 = vpack.c.b16 %v236, %v235
    %v247 = vpack.c.b16 %v238, %v237
    %v248 = vpack.c.b16 %v240, %v239
    %257 = vmatprep.subr.bf16.mxu0 0
    %258 = vmatpush1.bf16.msra.mxu0 %v241
    %259 = vmatprep.subr.bf16.mxu0 0
    %260 = vmatpush1.bf16.msra.mxu0 %v242
    %261 = vmatprep.subr.bf16.mxu0 0
    %262 = vmatpush1.bf16.msra.mxu0 %v243
    %263 = vmatprep.subr.bf16.mxu0 0
    %264 = vmatpush1.bf16.msra.mxu0 %v244
    %265 = vmatprep.subr.bf16.mxu0 0
    %266 = vmatpush1.bf16.msra.mxu0 %v245
    %267 = vmatprep.subr.bf16.mxu0 0
    %268 = vmatpush1.bf16.msra.mxu0 %v246
    %269 = vmatprep.subr.bf16.mxu0 0
    %270 = vmatpush1.bf16.msra.mxu0 %v247
    %271 = vmatprep.subr.bf16.mxu0 0
    %272 = vmatpush1.bf16.msra.mxu0 %v248
    %273 = vmatprep.subr.bf16.mxu0 0
    %274 = vmatpush1.bf16.msra.mxu0 0
    %275 = vmatprep.subr.bf16.mxu0 0
    %276 = vmatpush1.bf16.msra.mxu0 0
    %277 = vmatprep.subr.bf16.mxu0 0
    %278 = vmatpush1.bf16.msra.mxu0 0
    %279 = vmatprep.subr.bf16.mxu0 0
    %280 = vmatpush1.bf16.msra.mxu0 0
    %281 = vmatprep.subr.bf16.mxu0 0
    %282 = vmatpush1.bf16.msra.mxu0 0
    %283 = vmatprep.subr.bf16.mxu0 0
    %284 = vmatpush1.bf16.msra.mxu0 0
    %285 = vmatprep.subr.bf16.mxu0 0
    %286 = vmatpush1.bf16.msra.mxu0 0
    %287 = vmatprep.subr.bf16.mxu0 0
    %288 = vmatpush1.bf16.msra.mxu0 0
    %289 = vmatprep.mubr.bf16.mxu0 0
    %290 = vmatmul.mubr.bf16.gmra.mrb[0].mxu0 %v185
    %v291 = vpop.f32.mrb[0].mxu0
    %v292 = vadd.f32 %v207, %v291
    %v293 = vpop.f32.mrb[0].mxu0
    %v294 = vpop.f32.mrb[0].mxu0
    %v295 = vadd.f32 %v207, %v294
    %v296 = vpop.f32.mrb[0].mxu0
    %297 = vdwg.mxu0
    %298 = vst [vmem:[#allocation8] sm:$0xff] %v292
    %299 = vst [vmem:[#allocation8 + $0x8] sm:$0xff] %v295
    // Predicated region
    $region34: #{tpu_custom_call.1} parent=1 // pred_check
      _
    $region35: #{tpu_custom_call.1} parent=1 // pred_check_branch
      %301 = sbr.rel (0) target = $region37
    $region36: #{tpu_custom_call.1} parent=1 // pred_region
      %s303 = ssub.s32 256, 256
      %304 = vsyncadd [#allocation4], %s303
      %s305 = sshll.u32 [#allocation8], 4
      %s306 = int_to_ptr.vmem [resolvable:$true] %s305
      %311 = dma.vmem_to_hbm [thread:$0]  %s306, 256, %s5, [#allocation4], 128, 128, 8
    $region37: #{tpu_custom_call.1} parent=1 // pred_fallthru
      _
    // Predicated region
    $region38: #{tpu_custom_call.1} parent=1 // pred_check
      _
    $region39: #{tpu_custom_call.1} parent=1 // pred_check_branch
      %313 = sbr.rel (0) target = $region41
    $region40: #{tpu_custom_call.1} parent=1 // pred_region
      %314 = dma.done [#allocation4], 256
    $region41: #{tpu_custom_call.1} parent=1 // pred_fallthru
      _
    %315 = vsyncpa [#allocation3], 1
    %316 = vsyncpa [#allocation6], 1
    %317 = vsyncpa [#allocation4], 1

</llo_original>
